<compile_context>
chip_gen: v7x
topology: tpu7x:2x2x1
jax: 0.10.0
libtpu: 0.0.40
codegen_flags: <defaults>
</compile_context>

<pallas_src>
import jax
import jax.numpy as jnp
from jax.experimental import pallas as pl
from jax.experimental.pallas import tpu as pltpu


def mlp_kernel(w1_ref, b1_ref, w2_ref, b2_ref, x_ref, o_ref):
    # x_ref: (IN, BT) VMEM tile, batch along lanes. w*/b* refs are tiny SMEM arrays.
    hid, in_dim = w1_ref.shape          # (4, 4)
    out_dim = w2_ref.shape[0]           # 2

    x = x_ref[...]                      # (IN, BT) f32

    # fc1 + tanh: unrolled VPU multiply-accumulate (scalar from SMEM * lane row).
    h = []
    for o in range(hid):
        acc = x[0:1, :] * w1_ref[o, 0]
        for k in range(1, in_dim):
            acc = acc + x[k:k + 1, :] * w1_ref[o, k]
        h.append(jnp.tanh(acc + b1_ref[o]))          # (1, BT), tanh on the EUP

    # fc2: same pattern, write each output row directly into the lane-dense out tile.
    for o in range(out_dim):
        acc = h[0] * w2_ref[o, 0]
        for k in range(1, hid):
            acc = acc + h[k] * w2_ref[o, k]
        o_ref[o:o + 1, :] = (acc + b2_ref[o]).astype(o_ref.dtype)


def mlp_forward(x, w1, b1, w2, b2, *, block_b=256):
    """x: (B, 4); w1: (4, 4); b1: (4,); w2: (2, 4); b2: (2,). Returns (B, 2)."""
    B, in_dim = x.shape
    out_dim = w2.shape[0]

    # Batch-on-lanes layout, padded to a multiple of the lane tile.
    xT = x.T                                        # (4, B)
    num_blocks = pl.cdiv(B, block_b)
    Bp = num_blocks * block_b
    if Bp != B:
        xT = jnp.pad(xT, ((0, 0), (0, Bp - B)))

    smem_spec = pl.BlockSpec(memory_space=pltpu.MemorySpace.SMEM)

    outT = pl.pallas_call(
        mlp_kernel,
        out_shape=jax.ShapeDtypeStruct((out_dim, Bp), x.dtype),
        grid=(num_blocks,),
        in_specs=[
            smem_spec,                                           # w1 (resident)
            smem_spec,                                           # b1 (resident)
            smem_spec,                                           # w2 (resident)
            smem_spec,                                           # b2 (resident)
            pl.BlockSpec((in_dim, block_b), lambda i: (0, i)),   # x tile
        ],
        out_specs=pl.BlockSpec((out_dim, block_b), lambda i: (0, i)),
        compiler_params=pltpu.CompilerParams(
            dimension_semantics=("parallel",),
        ),
    )(w1, b1, w2, b2, xT)

    return outT[:, :B].T                            # back to (B, 2), PyTorch layout


if __name__ == "__main__":
    key = jax.random.PRNGKey(0)
    k_x, k_w1, k_b1, k_w2, k_b2 = jax.random.split(key, 5)

    B = 1024  # batch of cartpole observations (4 features each)
    x = jax.random.normal(k_x, (B, 4), dtype=jnp.float32)

    # Deterministic parameter init (shapes match nn.Linear(4,4) and nn.Linear(4,2)).
    w1 = jax.random.normal(k_w1, (4, 4), dtype=jnp.float32) * 0.5   # (out=4, in=4)
    b1 = jax.random.normal(k_b1, (4,), dtype=jnp.float32) * 0.1
    w2 = jax.random.normal(k_w2, (2, 4), dtype=jnp.float32) * 0.5   # (out=2, in=4)
    b2 = jax.random.normal(k_b2, (2,), dtype=jnp.float32) * 0.1

    out = mlp_forward(x, w1, b1, w2, b2)
    jax.block_until_ready(out)

    # Reference check in plain JAX (nn.Linear semantics: y = x @ W.T + b).
    ref = jnp.tanh(x @ w1.T + b1) @ w2.T + b2
    assert out.shape == (B, 2)
    assert jnp.allclose(out, ref, atol=1e-5, rtol=1e-5)

    # Also verify a ragged batch size (exercises the padding path).
    out_small = mlp_forward(x[:37], w1, b1, w2, b2)
    jax.block_until_ready(out_small)
    assert jnp.allclose(out_small, ref[:37], atol=1e-5, rtol=1e-5)

    print("KERNEL_OK")
</pallas_src>

<mosaic_0001>
module attributes {stable_mosaic.version = 11 : i64} {
  func.func @mlp_kernel(%arg0: i32, %arg1: memref<4x4xf32, #tpu.memory_space<smem>>, %arg2: memref<4xf32, #tpu.memory_space<smem>>, %arg3: memref<2x4xf32, #tpu.memory_space<smem>>, %arg4: memref<2xf32, #tpu.memory_space<smem>>, %arg5: memref<4x256xf32, #tpu.memory_space<vmem>>, %arg6: memref<2x256xf32, #tpu.memory_space<vmem>>) attributes {dimension_semantics = [#tpu.dimension_semantics<parallel>], iteration_bounds = array<i64: 4>, scalar_prefetch = 0 : i64, scratch_operands = 0 : i64, tpu.core_type = #tpu.core_type<tc>, window_params = [{transform_indices = @transform_0, window_bounds = array<i64: 4, 4>}, {transform_indices = @transform_1, window_bounds = array<i64: 4>}, {transform_indices = @transform_2, window_bounds = array<i64: 2, 4>}, {transform_indices = @transform_3, window_bounds = array<i64: 2>}, {transform_indices = @transform_4, window_bounds = array<i64: 4, 256>}, {transform_indices = @transform_5, window_bounds = array<i64: 2, 256>}]} {
    %c0 = arith.constant 0 : index
    %c0_0 = arith.constant 0 : index
    %0 = vector.load %arg5[%c0, %c0_0] : memref<4x256xf32, #tpu.memory_space<vmem>>, vector<4x256xf32>
    %1 = vector.extract_strided_slice %0 {offsets = [0, 0], sizes = [1, 256], strides = [1, 1]} : vector<4x256xf32> to vector<1x256xf32>
    %c0_1 = arith.constant 0 : index
    %c0_2 = arith.constant 0 : index
    %2 = memref.load %arg1[%c0_1, %c0_2] : memref<4x4xf32, #tpu.memory_space<smem>>
    %3 = vector.broadcast %2 : f32 to vector<1x256xf32>
    %4 = arith.mulf %1, %3 : vector<1x256xf32>
    %5 = vector.extract_strided_slice %0 {offsets = [1, 0], sizes = [1, 256], strides = [1, 1]} : vector<4x256xf32> to vector<1x256xf32>
    %c0_3 = arith.constant 0 : index
    %c1 = arith.constant 1 : index
    %6 = memref.load %arg1[%c0_3, %c1] : memref<4x4xf32, #tpu.memory_space<smem>>
    %7 = vector.broadcast %6 : f32 to vector<1x256xf32>
    %8 = arith.mulf %5, %7 : vector<1x256xf32>
    %9 = arith.addf %4, %8 : vector<1x256xf32>
    %10 = vector.extract_strided_slice %0 {offsets = [2, 0], sizes = [1, 256], strides = [1, 1]} : vector<4x256xf32> to vector<1x256xf32>
    %c0_4 = arith.constant 0 : index
    %c2 = arith.constant 2 : index
    %11 = memref.load %arg1[%c0_4, %c2] : memref<4x4xf32, #tpu.memory_space<smem>>
    %12 = vector.broadcast %11 : f32 to vector<1x256xf32>
    %13 = arith.mulf %10, %12 : vector<1x256xf32>
    %14 = arith.addf %9, %13 : vector<1x256xf32>
    %15 = vector.extract_strided_slice %0 {offsets = [3, 0], sizes = [1, 256], strides = [1, 1]} : vector<4x256xf32> to vector<1x256xf32>
    %c0_5 = arith.constant 0 : index
    %c3 = arith.constant 3 : index
    %16 = memref.load %arg1[%c0_5, %c3] : memref<4x4xf32, #tpu.memory_space<smem>>
    %17 = vector.broadcast %16 : f32 to vector<1x256xf32>
    %18 = arith.mulf %15, %17 : vector<1x256xf32>
    %19 = arith.addf %14, %18 : vector<1x256xf32>
    %c0_6 = arith.constant 0 : index
    %20 = memref.load %arg2[%c0_6] : memref<4xf32, #tpu.memory_space<smem>>
    %21 = vector.broadcast %20 : f32 to vector<1x256xf32>
    %22 = arith.addf %19, %21 : vector<1x256xf32>
    %23 = math.tanh %22 : vector<1x256xf32>
    %24 = vector.extract_strided_slice %0 {offsets = [0, 0], sizes = [1, 256], strides = [1, 1]} : vector<4x256xf32> to vector<1x256xf32>
    %c1_7 = arith.constant 1 : index
    %c0_8 = arith.constant 0 : index
    %25 = memref.load %arg1[%c1_7, %c0_8] : memref<4x4xf32, #tpu.memory_space<smem>>
    %26 = vector.broadcast %25 : f32 to vector<1x256xf32>
    %27 = arith.mulf %24, %26 : vector<1x256xf32>
    %28 = vector.extract_strided_slice %0 {offsets = [1, 0], sizes = [1, 256], strides = [1, 1]} : vector<4x256xf32> to vector<1x256xf32>
    %c1_9 = arith.constant 1 : index
    %c1_10 = arith.constant 1 : index
    %29 = memref.load %arg1[%c1_9, %c1_10] : memref<4x4xf32, #tpu.memory_space<smem>>
    %30 = vector.broadcast %29 : f32 to vector<1x256xf32>
    %31 = arith.mulf %28, %30 : vector<1x256xf32>
    %32 = arith.addf %27, %31 : vector<1x256xf32>
    %33 = vector.extract_strided_slice %0 {offsets = [2, 0], sizes = [1, 256], strides = [1, 1]} : vector<4x256xf32> to vector<1x256xf32>
    %c1_11 = arith.constant 1 : index
    %c2_12 = arith.constant 2 : index
    %34 = memref.load %arg1[%c1_11, %c2_12] : memref<4x4xf32, #tpu.memory_space<smem>>
    %35 = vector.broadcast %34 : f32 to vector<1x256xf32>
    %36 = arith.mulf %33, %35 : vector<1x256xf32>
    %37 = arith.addf %32, %36 : vector<1x256xf32>
    %38 = vector.extract_strided_slice %0 {offsets = [3, 0], sizes = [1, 256], strides = [1, 1]} : vector<4x256xf32> to vector<1x256xf32>
    %c1_13 = arith.constant 1 : index
    %c3_14 = arith.constant 3 : index
    %39 = memref.load %arg1[%c1_13, %c3_14] : memref<4x4xf32, #tpu.memory_space<smem>>
    %40 = vector.broadcast %39 : f32 to vector<1x256xf32>
    %41 = arith.mulf %38, %40 : vector<1x256xf32>
    %42 = arith.addf %37, %41 : vector<1x256xf32>
    %c1_15 = arith.constant 1 : index
    %43 = memref.load %arg2[%c1_15] : memref<4xf32, #tpu.memory_space<smem>>
    %44 = vector.broadcast %43 : f32 to vector<1x256xf32>
    %45 = arith.addf %42, %44 : vector<1x256xf32>
    %46 = math.tanh %45 : vector<1x256xf32>
    %47 = vector.extract_strided_slice %0 {offsets = [0, 0], sizes = [1, 256], strides = [1, 1]} : vector<4x256xf32> to vector<1x256xf32>
    %c2_16 = arith.constant 2 : index
    %c0_17 = arith.constant 0 : index
    %48 = memref.load %arg1[%c2_16, %c0_17] : memref<4x4xf32, #tpu.memory_space<smem>>
    %49 = vector.broadcast %48 : f32 to vector<1x256xf32>
    %50 = arith.mulf %47, %49 : vector<1x256xf32>
    %51 = vector.extract_strided_slice %0 {offsets = [1, 0], sizes = [1, 256], strides = [1, 1]} : vector<4x256xf32> to vector<1x256xf32>
    %c2_18 = arith.constant 2 : index
    %c1_19 = arith.constant 1 : index
    %52 = memref.load %arg1[%c2_18, %c1_19] : memref<4x4xf32, #tpu.memory_space<smem>>
    %53 = vector.broadcast %52 : f32 to vector<1x256xf32>
    %54 = arith.mulf %51, %53 : vector<1x256xf32>
    %55 = arith.addf %50, %54 : vector<1x256xf32>
    %56 = vector.extract_strided_slice %0 {offsets = [2, 0], sizes = [1, 256], strides = [1, 1]} : vector<4x256xf32> to vector<1x256xf32>
    %c2_20 = arith.constant 2 : index
    %c2_21 = arith.constant 2 : index
    %57 = memref.load %arg1[%c2_20, %c2_21] : memref<4x4xf32, #tpu.memory_space<smem>>
    %58 = vector.broadcast %57 : f32 to vector<1x256xf32>
    %59 = arith.mulf %56, %58 : vector<1x256xf32>
    %60 = arith.addf %55, %59 : vector<1x256xf32>
    %61 = vector.extract_strided_slice %0 {offsets = [3, 0], sizes = [1, 256], strides = [1, 1]} : vector<4x256xf32> to vector<1x256xf32>
    %c2_22 = arith.constant 2 : index
    %c3_23 = arith.constant 3 : index
    %62 = memref.load %arg1[%c2_22, %c3_23] : memref<4x4xf32, #tpu.memory_space<smem>>
    %63 = vector.broadcast %62 : f32 to vector<1x256xf32>
    %64 = arith.mulf %61, %63 : vector<1x256xf32>
    %65 = arith.addf %60, %64 : vector<1x256xf32>
    %c2_24 = arith.constant 2 : index
    %66 = memref.load %arg2[%c2_24] : memref<4xf32, #tpu.memory_space<smem>>
    %67 = vector.broadcast %66 : f32 to vector<1x256xf32>
    %68 = arith.addf %65, %67 : vector<1x256xf32>
    %69 = math.tanh %68 : vector<1x256xf32>
    %70 = vector.extract_strided_slice %0 {offsets = [0, 0], sizes = [1, 256], strides = [1, 1]} : vector<4x256xf32> to vector<1x256xf32>
    %c3_25 = arith.constant 3 : index
    %c0_26 = arith.constant 0 : index
    %71 = memref.load %arg1[%c3_25, %c0_26] : memref<4x4xf32, #tpu.memory_space<smem>>
    %72 = vector.broadcast %71 : f32 to vector<1x256xf32>
    %73 = arith.mulf %70, %72 : vector<1x256xf32>
    %74 = vector.extract_strided_slice %0 {offsets = [1, 0], sizes = [1, 256], strides = [1, 1]} : vector<4x256xf32> to vector<1x256xf32>
    %c3_27 = arith.constant 3 : index
    %c1_28 = arith.constant 1 : index
    %75 = memref.load %arg1[%c3_27, %c1_28] : memref<4x4xf32, #tpu.memory_space<smem>>
    %76 = vector.broadcast %75 : f32 to vector<1x256xf32>
    %77 = arith.mulf %74, %76 : vector<1x256xf32>
    %78 = arith.addf %73, %77 : vector<1x256xf32>
    %79 = vector.extract_strided_slice %0 {offsets = [2, 0], sizes = [1, 256], strides = [1, 1]} : vector<4x256xf32> to vector<1x256xf32>
    %c3_29 = arith.constant 3 : index
    %c2_30 = arith.constant 2 : index
    %80 = memref.load %arg1[%c3_29, %c2_30] : memref<4x4xf32, #tpu.memory_space<smem>>
    %81 = vector.broadcast %80 : f32 to vector<1x256xf32>
    %82 = arith.mulf %79, %81 : vector<1x256xf32>
    %83 = arith.addf %78, %82 : vector<1x256xf32>
    %84 = vector.extract_strided_slice %0 {offsets = [3, 0], sizes = [1, 256], strides = [1, 1]} : vector<4x256xf32> to vector<1x256xf32>
    %c3_31 = arith.constant 3 : index
    %c3_32 = arith.constant 3 : index
    %85 = memref.load %arg1[%c3_31, %c3_32] : memref<4x4xf32, #tpu.memory_space<smem>>
    %86 = vector.broadcast %85 : f32 to vector<1x256xf32>
    %87 = arith.mulf %84, %86 : vector<1x256xf32>
    %88 = arith.addf %83, %87 : vector<1x256xf32>
    %c3_33 = arith.constant 3 : index
    %89 = memref.load %arg2[%c3_33] : memref<4xf32, #tpu.memory_space<smem>>
    %90 = vector.broadcast %89 : f32 to vector<1x256xf32>
    %91 = arith.addf %88, %90 : vector<1x256xf32>
    %92 = math.tanh %91 : vector<1x256xf32>
    %c0_34 = arith.constant 0 : index
    %c0_35 = arith.constant 0 : index
    %93 = memref.load %arg3[%c0_34, %c0_35] : memref<2x4xf32, #tpu.memory_space<smem>>
    %94 = vector.broadcast %93 : f32 to vector<1x256xf32>
    %95 = arith.mulf %23, %94 : vector<1x256xf32>
    %c0_36 = arith.constant 0 : index
    %c1_37 = arith.constant 1 : index
    %96 = memref.load %arg3[%c0_36, %c1_37] : memref<2x4xf32, #tpu.memory_space<smem>>
    %97 = vector.broadcast %96 : f32 to vector<1x256xf32>
    %98 = arith.mulf %46, %97 : vector<1x256xf32>
    %99 = arith.addf %95, %98 : vector<1x256xf32>
    %c0_38 = arith.constant 0 : index
    %c2_39 = arith.constant 2 : index
    %100 = memref.load %arg3[%c0_38, %c2_39] : memref<2x4xf32, #tpu.memory_space<smem>>
    %101 = vector.broadcast %100 : f32 to vector<1x256xf32>
    %102 = arith.mulf %69, %101 : vector<1x256xf32>
    %103 = arith.addf %99, %102 : vector<1x256xf32>
    %c0_40 = arith.constant 0 : index
    %c3_41 = arith.constant 3 : index
    %104 = memref.load %arg3[%c0_40, %c3_41] : memref<2x4xf32, #tpu.memory_space<smem>>
    %105 = vector.broadcast %104 : f32 to vector<1x256xf32>
    %106 = arith.mulf %92, %105 : vector<1x256xf32>
    %107 = arith.addf %103, %106 : vector<1x256xf32>
    %c0_42 = arith.constant 0 : index
    %108 = memref.load %arg4[%c0_42] : memref<2xf32, #tpu.memory_space<smem>>
    %109 = vector.broadcast %108 : f32 to vector<1x256xf32>
    %110 = arith.addf %107, %109 : vector<1x256xf32>
    %c0_43 = arith.constant 0 : index
    %c0_44 = arith.constant 0 : index
    %111 = vector.load %arg6[%c0_43, %c0_44] : memref<2x256xf32, #tpu.memory_space<vmem>>, vector<1x256xf32>
    tpu.vector_store %arg6[%c0_43, %c0_44], %110 {strides = array<i32>} : memref<2x256xf32, #tpu.memory_space<vmem>>, vector<1x256xf32>,
    %c1_45 = arith.constant 1 : index
    %c0_46 = arith.constant 0 : index
    %112 = memref.load %arg3[%c1_45, %c0_46] : memref<2x4xf32, #tpu.memory_space<smem>>
    %113 = vector.broadcast %112 : f32 to vector<1x256xf32>
    %114 = arith.mulf %23, %113 : vector<1x256xf32>
    %c1_47 = arith.constant 1 : index
    %c1_48 = arith.constant 1 : index
    %115 = memref.load %arg3[%c1_47, %c1_48] : memref<2x4xf32, #tpu.memory_space<smem>>
    %116 = vector.broadcast %115 : f32 to vector<1x256xf32>
    %117 = arith.mulf %46, %116 : vector<1x256xf32>
    %118 = arith.addf %114, %117 : vector<1x256xf32>
    %c1_49 = arith.constant 1 : index
    %c2_50 = arith.constant 2 : index
    %119 = memref.load %arg3[%c1_49, %c2_50] : memref<2x4xf32, #tpu.memory_space<smem>>
    %120 = vector.broadcast %119 : f32 to vector<1x256xf32>
    %121 = arith.mulf %69, %120 : vector<1x256xf32>
    %122 = arith.addf %118, %121 : vector<1x256xf32>
    %c1_51 = arith.constant 1 : index
    %c3_52 = arith.constant 3 : index
    %123 = memref.load %arg3[%c1_51, %c3_52] : memref<2x4xf32, #tpu.memory_space<smem>>
    %124 = vector.broadcast %123 : f32 to vector<1x256xf32>
    %125 = arith.mulf %92, %124 : vector<1x256xf32>
    %126 = arith.addf %122, %125 : vector<1x256xf32>
    %c1_53 = arith.constant 1 : index
    %127 = memref.load %arg4[%c1_53] : memref<2xf32, #tpu.memory_space<smem>>
    %128 = vector.broadcast %127 : f32 to vector<1x256xf32>
    %129 = arith.addf %126, %128 : vector<1x256xf32>
    %c1_54 = arith.constant 1 : index
    %c0_55 = arith.constant 0 : index
    %130 = vector.load %arg6[%c1_54, %c0_55] : memref<2x256xf32, #tpu.memory_space<vmem>>, vector<1x256xf32>
    tpu.vector_store %arg6[%c1_54, %c0_55], %129 {strides = array<i32>} : memref<2x256xf32, #tpu.memory_space<vmem>>, vector<1x256xf32>,
    return
  }
  func.func @transform_0(%arg0: i32) -> (i32, i32) {
    %c0_i32 = arith.constant 0 : i32
    %c0_i32_0 = arith.constant 0 : i32
    %c0_i32_1 = arith.constant 0 : i32
    return %c0_i32, %c0_i32_0 : i32, i32
  }
  func.func @transform_1(%arg0: i32) -> i32 {
    %c0_i32 = arith.constant 0 : i32
    %c0_i32_0 = arith.constant 0 : i32
    return %c0_i32 : i32
  }
  func.func @transform_2(%arg0: i32) -> (i32, i32) {
    %c0_i32 = arith.constant 0 : i32
    %c0_i32_0 = arith.constant 0 : i32
    %c0_i32_1 = arith.constant 0 : i32
    return %c0_i32, %c0_i32_0 : i32, i32
  }
  func.func @transform_3(%arg0: i32) -> i32 {
    %c0_i32 = arith.constant 0 : i32
    %c0_i32_0 = arith.constant 0 : i32
    return %c0_i32 : i32
  }
  func.func @transform_4(%arg0: i32) -> (i32, i32) {
    %c0_i32 = arith.constant 0 : i32
    %c0_i32_0 = arith.constant 0 : i32
    return %c0_i32, %arg0 : i32, i32
  }
  func.func @transform_5(%arg0: i32) -> (i32, i32) {
    %c0_i32 = arith.constant 0 : i32
    %c0_i32_0 = arith.constant 0 : i32
    return %c0_i32, %arg0 : i32, i32
  }
}

</mosaic_0001>

<llo_original>
// kernel: tpu_custom_call.1
$region0: #{tpu_custom_call.1}
  #allocation0 [shape = 'u32[]', space=smem, size = 0x4, offset = 0x4, fixed_abs, tag = 'smem constant byte address 0x4 - core index']
  #allocation1 [shape = 'u32[144,128]{1,0:T(1,128)}', space=vmem, size = 0x12000, scoped, tag = 'internal scratch']
  %s0 = inlined_call_operand.hbm [shape: f32[4,4], index: 0, kind: input, shape index: {}]
  %s1 = inlined_call_operand.vmem [shape: f32[4], index: 1, kind: input, shape index: {}]
  %s2 = inlined_call_operand.vmem [shape: f32[2,4], index: 2, kind: input, shape index: {}]
  %s3 = inlined_call_operand.vmem [shape: f32[2], index: 3, kind: input, shape index: {}]
  %s4 = inlined_call_operand.hbm [shape: f32[4,1024], index: 4, kind: input, shape index: {}]
  %s5 = inlined_call_operand.hbm [shape: f32[2,1024], index: 5, kind: output, shape index: {}]
  %s6 = sld [smem:[#allocation0]]
  $region73: #{tpu_custom_call.1} parent=0
    _
  %s8 = ssub.s32 1, %s6
  %s9 = scalar_select 0, %s8, %s6
  $region1: #{tpu_custom_call.1} parent=0
    #allocation2 [shape = 'u8[2048]{0}', space=smem, size = 0x800, scoped, tag = 'input window, operand 0, single buffered']
    #allocation3 [shape = 's32[2]{0}', space=sflag, size = 0x8, scoped, tag = 'scoped memory for tpu_custom_call.1']
    #allocation4 [shape = 's32[2]{0}', space=sflag, size = 0x8, scoped, tag = 'scoped memory for tpu_custom_call.1']
    #allocation5 [shape = 's32[2]{0}', space=sflag, size = 0x8, scoped, tag = 'scoped memory for tpu_custom_call.1']
    #allocation6 [shape = 's32[2]{0}', space=sflag, size = 0x8, scoped, tag = 'scoped memory for tpu_custom_call.1']
    #allocation7 [shape = 'u8[512]{0}', space=smem, size = 0x200, scoped, tag = 'input window, operand 1, single buffered']
    #allocation8 [shape = 'u8[1024]{0}', space=smem, size = 0x400, scoped, tag = 'input window, operand 2, single buffered']
    #allocation9 [shape = 's32[1]{0}', space=sflag, size = 0x4, scoped, tag = 'scoped memory for tpu_custom_call.1']
    #allocation10 [shape = 'u8[512]{0}', space=smem, size = 0x200, scoped, tag = 'input window, operand 3, single buffered']
    #allocation11 [shape = 'u8[8192]{0}', space=vmem, size = 0x2000, scoped, tag = 'input window, operand 4']
    #allocation12 [shape = 'u8[4096]{0}', space=vmem, size = 0x1000, scoped, tag = 'output window, operand 0']
    %10 = vsyncpa [#allocation5], 0
    %11 = vsyncpa [#allocation6], 0
    %12 = vsyncpa [#allocation9], 0
    %13 = vsyncpa [#allocation3], 0
    %s14 = scalar_lea.sflag [#allocation3], 1
    %15 = vsyncpa %s14, 0
    %16 = vsyncpa [#allocation4], 0
    %s17 = scalar_lea.sflag [#allocation4], 1
    %18 = vsyncpa %s17, 0
    loop: start=0, step=1, limit=6
    $region2: #{tpu_custom_call.1} parent=1 // loop_pre_header
      _
    $region3: #{tpu_custom_call.1} parent=1 // loop_header
      %s20 = sphi 0, %s24
      %p21 = scmp.ge.s32.totalorder %s20, 6
      %s28 = sphi 0, %s28
      %s30 = sphi 0, %s28
      %s31 = sphi 0, %s30
      %s45 = sphi 0, %s31
      %s49 = sphi 0, %s49
      %s51 = sphi 0, %s49
      %s52 = sphi 0, %s51
      %s66 = sphi 0, %s52
      %s70 = sphi 0, %s70
      %s72 = sphi 0, %s70
      %s73 = sphi 0, %s72
      %s87 = sphi 0, %s73
      %s91 = sphi 0, %s91
      %s93 = sphi 0, %s91
      %s94 = sphi 0, %s93
      %s108 = sphi 0, %s94
      %s114 = sphi 0, %s116
      %s117 = sphi 0, %s114
      %s118 = sphi 0, %s117
      %s134 = sphi 0, %s118
      %s140 = sphi 0, %s142
      %s143 = sphi 0, %s140
      %s144 = sphi 0, %s143
      %s160 = sphi 0, %s144
    $region4: #{tpu_custom_call.1} parent=1 // loop_header_branch
      %23 = sbr.rel (%p21) target = $region8
    $region5: #{tpu_custom_call.1} parent=1 // loop_body
      %s25 = ssub.s32 %s20, 1
      %s26 = ssub.s32 %s20, 2
      %s27 = sadd.s32 %s20, 1
      %s29 = sadd.s32 %s28, 1
      %p32 = scmp.eq.s32.totalorder %s20, 3
      %p33 = scmp.ne.s32.totalorder %s28, %s30
      %p34 = scmp.eq.s32.totalorder %s20, 0
      %p35 = por %p33, %p34
      %p36 = scmp.ne.s32.totalorder %s28, %s30
      %p37 = scmp.eq.s32.totalorder %s25, 3
      %p38 = por %p36, %p37
      %p39 = scmp.ne.s32.totalorder %s30, %s31
      %p40 = scmp.eq.s32.totalorder %s25, 0
      %p41 = por %p39, %p40
      %p42 = scmp.ne.s32.totalorder %s30, %s31
      %p43 = scmp.eq.s32.totalorder %s26, 3
      %p44 = por %p42, %p43
      %p46 = scmp.ne.s32.totalorder %s31, %s45
      %p47 = scmp.eq.s32.totalorder %s26, 0
      %p48 = por %p46, %p47
      %s50 = sadd.s32 %s49, 1
      %p53 = scmp.eq.s32.totalorder %s20, 3
      %p54 = scmp.ne.s32.totalorder %s49, %s51
      %p55 = scmp.eq.s32.totalorder %s20, 0
      %p56 = por %p54, %p55
      %p57 = scmp.ne.s32.totalorder %s49, %s51
      %p58 = scmp.eq.s32.totalorder %s25, 3
      %p59 = por %p57, %p58
      %p60 = scmp.ne.s32.totalorder %s51, %s52
      %p61 = scmp.eq.s32.totalorder %s25, 0
      %p62 = por %p60, %p61
      %p63 = scmp.ne.s32.totalorder %s51, %s52
      %p64 = scmp.eq.s32.totalorder %s26, 3
      %p65 = por %p63, %p64
      %p67 = scmp.ne.s32.totalorder %s52, %s66
      %p68 = scmp.eq.s32.totalorder %s26, 0
      %p69 = por %p67, %p68
      %s71 = sadd.s32 %s70, 1
      %p74 = scmp.eq.s32.totalorder %s20, 3
      %p75 = scmp.ne.s32.totalorder %s70, %s72
      %p76 = scmp.eq.s32.totalorder %s20, 0
      %p77 = por %p75, %p76
      %p78 = scmp.ne.s32.totalorder %s70, %s72
      %p79 = scmp.eq.s32.totalorder %s25, 3
      %p80 = por %p78, %p79
      %p81 = scmp.ne.s32.totalorder %s72, %s73
      %p82 = scmp.eq.s32.totalorder %s25, 0
      %p83 = por %p81, %p82
      %p84 = scmp.ne.s32.totalorder %s72, %s73
      %p85 = scmp.eq.s32.totalorder %s26, 3
      %p86 = por %p84, %p85
      %p88 = scmp.ne.s32.totalorder %s73, %s87
      %p89 = scmp.eq.s32.totalorder %s26, 0
      %p90 = por %p88, %p89
      %s92 = sadd.s32 %s91, 1
      %p95 = scmp.eq.s32.totalorder %s20, 3
      %p96 = scmp.ne.s32.totalorder %s91, %s93
      %p97 = scmp.eq.s32.totalorder %s20, 0
      %p98 = por %p96, %p97
      %p99 = scmp.ne.s32.totalorder %s91, %s93
      %p100 = scmp.eq.s32.totalorder %s25, 3
      %p101 = por %p99, %p100
      %p102 = scmp.ne.s32.totalorder %s93, %s94
      %p103 = scmp.eq.s32.totalorder %s25, 0
      %p104 = por %p102, %p103
      %p105 = scmp.ne.s32.totalorder %s93, %s94
      %p106 = scmp.eq.s32.totalorder %s26, 3
      %p107 = por %p105, %p106
      %p109 = scmp.ne.s32.totalorder %s94, %s108
      %p110 = scmp.eq.s32.totalorder %s26, 0
      %p111 = por %p109, %p110
      %s112 = ssub.s32 %s20, %s27
      %p113 = scmp.eq.s32.totalorder %s112, 0
      %s115 = sadd.s32 %s114, 1
      %s116 = scalar_select %p113, %s114, %s115
      %p119 = pneg %p113
      %p120 = scmp.eq.s32.totalorder %s20, 3
      %p121 = por %p119, %p120
      %p122 = scmp.ne.s32.totalorder %s114, %s117
      %p123 = scmp.eq.s32.totalorder %s20, 0
      %p124 = por %p122, %p123
      %p125 = scmp.ne.s32.totalorder %s114, %s117
      %p126 = scmp.eq.s32.totalorder %s25, 3
      %p127 = por %p125, %p126
      %p128 = scmp.ne.s32.totalorder %s117, %s118
      %p129 = scmp.eq.s32.totalorder %s25, 0
      %p130 = por %p128, %p129
      %p131 = scmp.ne.s32.totalorder %s117, %s118
      %p132 = scmp.eq.s32.totalorder %s26, 3
      %p133 = por %p131, %p132
      %p135 = scmp.ne.s32.totalorder %s118, %s134
      %p136 = scmp.eq.s32.totalorder %s26, 0
      %p137 = por %p135, %p136
      %s138 = ssub.s32 %s20, %s27
      %p139 = scmp.eq.s32.totalorder %s138, 0
      %s141 = sadd.s32 %s140, 1
      %s142 = scalar_select %p139, %s140, %s141
      %p145 = pneg %p139
      %p146 = scmp.eq.s32.totalorder %s20, 3
      %p147 = por %p145, %p146
      %p148 = scmp.ne.s32.totalorder %s140, %s143
      %p149 = scmp.eq.s32.totalorder %s20, 0
      %p150 = por %p148, %p149
      %p151 = scmp.ne.s32.totalorder %s140, %s143
      %p152 = scmp.eq.s32.totalorder %s25, 3
      %p153 = por %p151, %p152
      %p154 = scmp.ne.s32.totalorder %s143, %s144
      %p155 = scmp.eq.s32.totalorder %s25, 0
      %p156 = por %p154, %p155
      %p157 = scmp.ne.s32.totalorder %s143, %s144
      %p158 = scmp.eq.s32.totalorder %s26, 3
      %p159 = por %p157, %p158
      %p161 = scmp.ne.s32.totalorder %s144, %s160
      %p162 = scmp.eq.s32.totalorder %s26, 0
      %p163 = por %p161, %p162
      %p164 = scmp.le.s32.totalorder 1, %s20
      %p165 = scmp.lt.s32.totalorder %s20, 5
      %p166 = pnand %p164, %p165
      %p167 = pneg %p166
      // Predicated region
      $region9: #{tpu_custom_call.1} parent=5 // pred_check
        _
      $region10: #{tpu_custom_call.1} parent=5 // pred_check_branch
        %169 = sbr.rel (%p166) target = $region12
      $region11: #{tpu_custom_call.1} parent=5 // pred_region
        %s170 = ssub.s32 %s20, 1
        // Predicated region
        $region13: #{tpu_custom_call.1} parent=11 // pred_check
          %p171 = pneg %p41
        $region14: #{tpu_custom_call.1} parent=11 // pred_check_branch
          %173 = sbr.rel (%p171) target = $region16
        $region15: #{tpu_custom_call.1} parent=11 // pred_region
          %s175 = ssub.s32 64, 64
          %176 = vsyncadd [#allocation5], %s175
          %179 = dma.hbm_to_smem %s0, 64, [#allocation2], [#allocation5]
        $region16: #{tpu_custom_call.1} parent=11 // pred_fallthru
          _
        // Predicated region
        $region17: #{tpu_custom_call.1} parent=11 // pred_check
          %p180 = pneg %p62
        $region18: #{tpu_custom_call.1} parent=11 // pred_check_branch
          %182 = sbr.rel (%p180) target = $region20
        $region19: #{tpu_custom_call.1} parent=11 // pred_region
          %s184 = ssub.s32 16, 16
          %185 = vsyncadd [#allocation6], %s184
          %s187 = sshll.u32 %s1, 4
          %s188 = int_to_ptr.vmem [resolvable:$true] %s187
          %190 = dma.vmem_to_smem %s188, 16, [#allocation7], [#allocation6]
        $region20: #{tpu_custom_call.1} parent=11 // pred_fallthru
          _
        // Predicated region
        $region21: #{tpu_custom_call.1} parent=11 // pred_check
          %p191 = pneg %p83
        $region22: #{tpu_custom_call.1} parent=11 // pred_check_branch
          %193 = sbr.rel (%p191) target = $region24
        $region23: #{tpu_custom_call.1} parent=11 // pred_region
          %s195 = ssub.s32 32, 32
          %196 = vsyncadd [#allocation9], %s195
          %s198 = sshll.u32 %s2, 4
          %s199 = int_to_ptr.vmem [resolvable:$true] %s198
          %201 = dma.vmem_to_smem %s199, 32, [#allocation8], [#allocation9]
        $region24: #{tpu_custom_call.1} parent=11 // pred_fallthru
          _
        // Predicated region
        $region25: #{tpu_custom_call.1} parent=11 // pred_check
          %p202 = pneg %p104
        $region26: #{tpu_custom_call.1} parent=11 // pred_check_branch
          %204 = sbr.rel (%p202) target = $region28
        $region27: #{tpu_custom_call.1} parent=11 // pred_region
          %s206 = ssub.s32 16, 16
          %207 = vsyncadd [#allocation9], %s206
          %s209 = sshll.u32 %s3, 4
          %s210 = int_to_ptr.vmem [resolvable:$true] %s209
          %212 = dma.vmem_to_smem %s210, 16, [#allocation10], [#allocation9]
        $region28: #{tpu_custom_call.1} parent=11 // pred_fallthru
          _
      $region12: #{tpu_custom_call.1} parent=5 // pred_fallthru
        _
      %p213 = scmp.lt.s32.totalorder %s20, 4
      // Predicated region
      $region29: #{tpu_custom_call.1} parent=5 // pred_check
        %p214 = pneg %p213
      $region30: #{tpu_custom_call.1} parent=5 // pred_check_branch
        %216 = sbr.rel (%p214) target = $region32
      $region31: #{tpu_custom_call.1} parent=5 // pred_region
        // Predicated region
        $region33: #{tpu_custom_call.1} parent=31 // pred_check
          %p217 = pneg %p124
        $region34: #{tpu_custom_call.1} parent=31 // pred_check_branch
          %219 = sbr.rel (%p217) target = $region36
        $region35: #{tpu_custom_call.1} parent=31 // pred_region
          %s220 = sand.u32 %s114, 1
          %s221 = scalar_lea.sflag [#allocation3], %s220
          %s222 = sand.u32 %s114, 1
          %s223 = smul.addr %s222, 8
          %s224 = scalar_lea.vmem [#allocation11], %s223
          %s225 = smul.u32 2, %s20
          %s227 = ssub.s32 128, 128
          %228 = vsyncadd %s221, %s227
          %s229 = smul.addr %s225, 64
          %s230 = scalar_lea.hbm %s4, %s229
          %s232 = sshll.u32 %s224, 4
          %s233 = int_to_ptr.vmem [resolvable:$true] %s232
          %235 = dma.hbm_to_vmem [thread:$0]  %s230, 128, %s233, %s221
        $region36: #{tpu_custom_call.1} parent=31 // pred_fallthru
          _
      $region32: #{tpu_custom_call.1} parent=5 // pred_fallthru
        _
      %p236 = scmp.le.s32.totalorder 1, %s20
      %p237 = scmp.lt.s32.totalorder %s20, 5
      %p238 = pnand %p236, %p237
      %p239 = pneg %p238
      // Predicated region
      $region37: #{tpu_custom_call.1} parent=5 // pred_check
        _
      $region38: #{tpu_custom_call.1} parent=5 // pred_check_branch
        %241 = sbr.rel (%p238) target = $region40
      $region39: #{tpu_custom_call.1} parent=5 // pred_region
        %s242 = ssub.s32 %s20, 1
        // Predicated region
        $region41: #{tpu_custom_call.1} parent=39 // pred_check
          %p243 = pneg %p41
        $region42: #{tpu_custom_call.1} parent=39 // pred_check_branch
          %245 = sbr.rel (%p243) target = $region44
        $region43: #{tpu_custom_call.1} parent=39 // pred_region
          %246 = dma.done [#allocation5], 64
        $region44: #{tpu_custom_call.1} parent=39 // pred_fallthru
          _
        // Predicated region
        $region45: #{tpu_custom_call.1} parent=39 // pred_check
          %p247 = pneg %p62
        $region46: #{tpu_custom_call.1} parent=39 // pred_check_branch
          %249 = sbr.rel (%p247) target = $region48
        $region47: #{tpu_custom_call.1} parent=39 // pred_region
          %250 = dma.done [#allocation6], 16
        $region48: #{tpu_custom_call.1} parent=39 // pred_fallthru
          _
        // Predicated region
        $region49: #{tpu_custom_call.1} parent=39 // pred_check
          %p251 = pneg %p83
        $region50: #{tpu_custom_call.1} parent=39 // pred_check_branch
          %253 = sbr.rel (%p251) target = $region52
        $region51: #{tpu_custom_call.1} parent=39 // pred_region
          %254 = dma.done [#allocation9], 32
        $region52: #{tpu_custom_call.1} parent=39 // pred_fallthru
          _
        // Predicated region
        $region53: #{tpu_custom_call.1} parent=39 // pred_check
          %p255 = pneg %p104
        $region54: #{tpu_custom_call.1} parent=39 // pred_check_branch
          %257 = sbr.rel (%p255) target = $region56
        $region55: #{tpu_custom_call.1} parent=39 // pred_region
          %258 = dma.done [#allocation9], 16
        $region56: #{tpu_custom_call.1} parent=39 // pred_fallthru
          _
        %s259 = sand.u32 %s117, 1
        %s260 = scalar_lea.sflag [#allocation3], %s259
        %s261 = sand.u32 %s117, 1
        %s262 = smul.addr %s261, 8
        %s263 = scalar_lea.vmem [#allocation11], %s262
        // Predicated region
        $region57: #{tpu_custom_call.1} parent=39 // pred_check
          %p264 = pneg %p130
        $region58: #{tpu_custom_call.1} parent=39 // pred_check_branch
          %266 = sbr.rel (%p264) target = $region60
        $region59: #{tpu_custom_call.1} parent=39 // pred_region
          %267 = dma.done %s260, 128
        $region60: #{tpu_custom_call.1} parent=39 // pred_fallthru
          _
        %268 = sfence
        %p269 = pneg %p41
        %p270 = pneg %p38
        %p271 = pneg %p62
        %p272 = pneg %p59
        %p273 = pneg %p83
        %p274 = pneg %p80
        %p275 = pneg %p104
        %p276 = pneg %p101
        %s277 = sand.u32 %s117, 1
        %s278 = scalar_lea.sflag [#allocation3], %s277
        %s279 = sand.u32 %s117, 1
        %s280 = smul.addr %s279, 8
        %s281 = scalar_lea.vmem [#allocation11], %s280
        %p282 = pneg %p130
        %p283 = pneg %p127
        %p284 = pneg %p156
        %p285 = pneg %p153
        %s286 = sand.u32 %s143, 1
        %s287 = scalar_lea.sflag [#allocation4], %s286
        %s288 = sand.u32 %s143, 1
        %s289 = smul.addr %s288, 4
        %s290 = scalar_lea.vmem [#allocation12], %s289
        %s291 = smul.u32 2, %s25
        %s292 = smul.u32 2, %s25
        %v293 = vld [vmem:[%s263] sm:$0xff]
        %s294 = sld [smem:[#allocation2]]
        %v295 = vstv %s294
        %v296 = vmul.f32 %v293, %v295
        %s297 = sld [smem:[#allocation2 + $0x1]]
        %v298 = vstv %s297
        %v299 = vmul.f32 %v293, %v298
        %v301 = vrot.slane %v299, 5
        %v302 = vrot.slane %v301, 4
        %v304 = vadd.f32 %v296, %v302
        %s305 = sld [smem:[#allocation2 + $0x2]]
        %v306 = vstv %s305
        %v307 = vmul.f32 %v293, %v306
        %v309 = vrot.slane %v307, 6
        %v310 = vrot.slane %v309, 4
        %v312 = vadd.f32 %v304, %v310
        %s313 = sld [smem:[#allocation2 + $0x3]]
        %v314 = vstv %s313
        %v315 = vmul.f32 %v293, %v314
        %v317 = vrot.slane %v315, 7
        %v318 = vrot.slane %v317, 4
        %v320 = vadd.f32 %v312, %v318
        %s321 = sld [smem:[#allocation7]]
        %v322 = vstv %s321
        %v323 = vadd.f32 %v320, %v322
        %v324 = vtanh.pop %v323
        %s325 = sld [smem:[#allocation2 + $0x80]]
        %v326 = vstv %s325
        %v327 = vmul.f32 %v293, %v326
        %s328 = sld [smem:[#allocation2 + $0x81]]
        %v329 = vstv %s328
        %v330 = vmul.f32 %v293, %v329
        %v332 = vrot.slane %v330, 5
        %v333 = vrot.slane %v332, 4
        %v335 = vadd.f32 %v327, %v333
        %s336 = sld [smem:[#allocation2 + $0x82]]
        %v337 = vstv %s336
        %v338 = vmul.f32 %v293, %v337
        %v340 = vrot.slane %v338, 6
        %v341 = vrot.slane %v340, 4
        %v343 = vadd.f32 %v335, %v341
        %s344 = sld [smem:[#allocation2 + $0x83]]
        %v345 = vstv %s344
        %v346 = vmul.f32 %v293, %v345
        %v348 = vrot.slane %v346, 7
        %v349 = vrot.slane %v348, 4
        %v351 = vadd.f32 %v343, %v349
        %s352 = sld [smem:[#allocation7 + $0x1]]
        %v353 = vstv %s352
        %v354 = vadd.f32 %v351, %v353
        %v355 = vtanh.pop %v354
        %s356 = sld [smem:[#allocation2 + $0x100]]
        %v357 = vstv %s356
        %v358 = vmul.f32 %v293, %v357
        %s359 = sld [smem:[#allocation2 + $0x101]]
        %v360 = vstv %s359
        %v361 = vmul.f32 %v293, %v360
        %v363 = vrot.slane %v361, 5
        %v364 = vrot.slane %v363, 4
        %v366 = vadd.f32 %v358, %v364
        %s367 = sld [smem:[#allocation2 + $0x102]]
        %v368 = vstv %s367
        %v369 = vmul.f32 %v293, %v368
        %v371 = vrot.slane %v369, 6
        %v372 = vrot.slane %v371, 4
        %v374 = vadd.f32 %v366, %v372
        %s375 = sld [smem:[#allocation2 + $0x103]]
        %v376 = vstv %s375
        %v377 = vmul.f32 %v293, %v376
        %v379 = vrot.slane %v377, 7
        %v380 = vrot.slane %v379, 4
        %v382 = vadd.f32 %v374, %v380
        %s383 = sld [smem:[#allocation7 + $0x2]]
        %v384 = vstv %s383
        %v385 = vadd.f32 %v382, %v384
        %v386 = vtanh.pop %v385
        %s387 = sld [smem:[#allocation2 + $0x180]]
        %v388 = vstv %s387
        %v389 = vmul.f32 %v293, %v388
        %s390 = sld [smem:[#allocation2 + $0x181]]
        %v391 = vstv %s390
        %v392 = vmul.f32 %v293, %v391
        %v394 = vrot.slane %v392, 5
        %v395 = vrot.slane %v394, 4
        %v397 = vadd.f32 %v389, %v395
        %s398 = sld [smem:[#allocation2 + $0x182]]
        %v399 = vstv %s398
        %v400 = vmul.f32 %v293, %v399
        %v402 = vrot.slane %v400, 6
        %v403 = vrot.slane %v402, 4
        %v405 = vadd.f32 %v397, %v403
        %s406 = sld [smem:[#allocation2 + $0x183]]
        %v407 = vstv %s406
        %v408 = vmul.f32 %v293, %v407
        %v410 = vrot.slane %v408, 7
        %v411 = vrot.slane %v410, 4
        %v413 = vadd.f32 %v405, %v411
        %s414 = sld [smem:[#allocation7 + $0x3]]
        %v415 = vstv %s414
        %v416 = vadd.f32 %v413, %v415
        %v417 = vtanh.pop %v416
        %s418 = sld [smem:[#allocation8]]
        %v419 = vstv %s418
        %v420 = vmul.f32 %v324, %v419
        %s421 = sld [smem:[#allocation8 + $0x1]]
        %v422 = vstv %s421
        %v423 = vmul.f32 %v355, %v422
        %v424 = vadd.f32 %v420, %v423
        %s425 = sld [smem:[#allocation8 + $0x2]]
        %v426 = vstv %s425
        %v427 = vmul.f32 %v386, %v426
        %v428 = vadd.f32 %v424, %v427
        %s429 = sld [smem:[#allocation8 + $0x3]]
        %v430 = vstv %s429
        %v431 = vmul.f32 %v417, %v430
        %v432 = vadd.f32 %v428, %v431
        %s433 = sld [smem:[#allocation10]]
        %v434 = vstv %s433
        %v435 = vadd.f32 %v432, %v434
        %v438 = vunpack.c.l.s4 1966171168
        %v439 = vunpack.c.0.s8 %v438
        %v440 = vlaneseq
        %v441 = vshrl.u32 %v440, 7
        %v442 = vsub.s32 %v439, %v441
        %v443 = vrot.slane %v435, %v442
        %v445 = vunpack.c.l.s4 1966171168
        %v446 = vunpack.c.0.s8 %v445
        %v447 = vlaneseq
        %v448 = vshrl.u32 %v447, 7
        %v449 = vsub.s32 %v446, %v448
        %v450 = vrot.slane %v443, %v449
        %v452 = vlaneseq
        %vm453 = vcmp.ge.s32.totalorder %v452, 0
        %vm454 = vcmp.lt.s32.totalorder %v452, 256
        %vm455 = vmand %vm453, %vm454
        %456 = vst.msk [vmem:[%s290] ss:$2 sm:$0x3] %vm455, %v450
        %s457 = sld [smem:[#allocation8 + $0x80]]
        %v458 = vstv %s457
        %v459 = vmul.f32 %v324, %v458
        %s460 = sld [smem:[#allocation8 + $0x81]]
        %v461 = vstv %s460
        %v462 = vmul.f32 %v355, %v461
        %v463 = vadd.f32 %v459, %v462
        %s464 = sld [smem:[#allocation8 + $0x82]]
        %v465 = vstv %s464
        %v466 = vmul.f32 %v386, %v465
        %v467 = vadd.f32 %v463, %v466
        %s468 = sld [smem:[#allocation8 + $0x83]]
        %v469 = vstv %s468
        %v470 = vmul.f32 %v417, %v469
        %v471 = vadd.f32 %v467, %v470
        %s472 = sld [smem:[#allocation10 + $0x1]]
        %v473 = vstv %s472
        %v474 = vadd.f32 %v471, %v473
        %v477 = vunpack.c.l.s4 1966171168
        %v478 = vunpack.c.0.s8 %v477
        %v479 = vlaneseq
        %v480 = vshrl.u32 %v479, 7
        %v481 = vsub.s32 %v478, %v480
        %v482 = vrot.slane %v474, %v481
        %v484 = vunpack.c.l.s4 1966171168
        %v485 = vunpack.c.0.s8 %v484
        %v486 = vlaneseq
        %v487 = vshrl.u32 %v486, 7
        %v488 = vsub.s32 %v485, %v487
        %v489 = vrot.slane %v482, %v488
        %s491 = scalar_lea.vmem %s290, 1 [#allocation12]
        %492 = vst.msk [vmem:[%s491] ss:$2 sm:$0x3] %vm455, %v489
        %s493 = sand.u32 %s143, 1
        %s494 = scalar_lea.sflag [#allocation4], %s493
        %s495 = sand.u32 %s143, 1
        %s496 = smul.addr %s495, 4
        %s497 = scalar_lea.vmem [#allocation12], %s496
        // Predicated region
        $region61: #{tpu_custom_call.1} parent=39 // pred_check
          %p498 = pneg %p153
        $region62: #{tpu_custom_call.1} parent=39 // pred_check_branch
          %500 = sbr.rel (%p498) target = $region64
        $region63: #{tpu_custom_call.1} parent=39 // pred_region
          %s501 = smul.u32 2, %s25
          %s503 = ssub.s32 64, 64
          %504 = vsyncadd %s494, %s503
          %s505 = smul.addr %s501, 32
          %s506 = scalar_lea.hbm %s5, %s505
          %s508 = sshll.u32 %s497, 4
          %s509 = int_to_ptr.vmem [resolvable:$true] %s508
          %511 = dma.vmem_to_hbm [thread:$0]  %s509, 64, %s506, %s494
        $region64: #{tpu_custom_call.1} parent=39 // pred_fallthru
          _
      $region40: #{tpu_custom_call.1} parent=5 // pred_fallthru
        _
      %p512 = scmp.le.s32.totalorder 2, %s20
      // Predicated region
      $region65: #{tpu_custom_call.1} parent=5 // pred_check
        %p513 = pneg %p512
      $region66: #{tpu_custom_call.1} parent=5 // pred_check_branch
        %515 = sbr.rel (%p513) target = $region68
      $region67: #{tpu_custom_call.1} parent=5 // pred_region
        %s516 = ssub.s32 %s20, 2
        // Predicated region
        $region69: #{tpu_custom_call.1} parent=67 // pred_check
          %p517 = pneg %p159
        $region70: #{tpu_custom_call.1} parent=67 // pred_check_branch
          %519 = sbr.rel (%p517) target = $region72
        $region71: #{tpu_custom_call.1} parent=67 // pred_region
          %s520 = sand.u32 %s144, 1
          %s521 = scalar_lea.sflag [#allocation4], %s520
          %s522 = sand.u32 %s144, 1
          %s523 = smul.addr %s522, 4
          %s524 = scalar_lea.vmem [#allocation12], %s523
          %525 = dma.done %s521, 64
        $region72: #{tpu_custom_call.1} parent=67 // pred_fallthru
          _
      $region68: #{tpu_custom_call.1} parent=5 // pred_fallthru
        _
    $region6: #{tpu_custom_call.1} parent=1 // loop_footer
      %s24 = sadd.s32 1, %s20
    $region7: #{tpu_custom_call.1} parent=1 // loop_footer_branch
      %19 = sbr.rel target = $region3
    $region8: #{tpu_custom_call.1} parent=1 // loop_exit
      _
    %526 = vsyncpa [#allocation3], 1
    %s527 = scalar_lea.sflag [#allocation3], 1
    %528 = vsyncpa %s527, 1
    %529 = vsyncpa [#allocation4], 1
    %s530 = scalar_lea.sflag [#allocation4], 1
    %531 = vsyncpa %s530, 1
    %532 = vsyncpa [#allocation5], 1
    %s533 = scalar_lea.sflag [#allocation5], 1
    %534 = vsyncpa %s533, 1
    %535 = vsyncpa [#allocation6], 1
    %s536 = scalar_lea.sflag [#allocation6], 1
    %537 = vsyncpa %s536, 1
    %538 = vsyncpa [#allocation9], 1

</llo_original>
